<compile_context>
chip_gen: v7x
topology: tpu7x:2x2x1
jax: 0.10.0
libtpu: 0.0.40
codegen_flags: <defaults>
</compile_context>

<pallas_src>
import numpy as np
import jax
import jax.numpy as jnp
from jax.experimental import pallas as pl
from jax.experimental.pallas import tpu as pltpu


def _round_up(v, m):
    return ((v + m - 1) // m) * m


def _pad_to(a, shape, dtype=jnp.bfloat16):
    # Cast in the wrapper (bf16 MXU operands), zero-pad to tile-friendly shape.
    pads = [(0, s - d) for d, s in zip(a.shape, shape)]
    return jnp.pad(a.astype(dtype), pads)


def _vmem_limit_bytes():
    # Per-generation scoped-VMEM cap: v5e/v6e have 128 MiB physical VMEM,
    # v7x only 64 MiB.  Tiles here are tiny (<2 MiB), so this is just a
    # conservative ceiling that is valid on every generation.
    try:
        cap = pltpu.get_tpu_info().vmem_capacity_bytes
        return int(min(cap * 3 // 4, 64 * 1024 * 1024))
    except Exception:
        return 32 * 1024 * 1024


# ----------------------------------------------------------------------------
# Generic tiled matmul: O = A @ B, B kept fully lane-resident along N.
# Grid = (row tiles of A, K tiles); f32 accumulator, bf16 output.
# ----------------------------------------------------------------------------
def _matmul_kernel(a_ref, b_ref, o_ref, acc_ref):
    k = pl.program_id(1)

    @pl.when(k == 0)
    def _():
        acc_ref[...] = jnp.zeros_like(acc_ref)

    acc_ref[...] += jnp.dot(a_ref[...], b_ref[...],
                            preferred_element_type=jnp.float32)

    @pl.when(k == pl.num_programs(1) - 1)
    def _():
        o_ref[...] = acc_ref[...].astype(o_ref.dtype)


def _tiled_matmul(a, b, *, tm, tk, out_dtype, vmem_limit):
    m, kdim = a.shape
    _, n = b.shape
    grid = (m // tm, kdim // tk)
    return pl.pallas_call(
        _matmul_kernel,
        out_shape=jax.ShapeDtypeStruct((m, n), out_dtype),
        grid_spec=pltpu.PrefetchScalarGridSpec(
            num_scalar_prefetch=0,
            grid=grid,
            in_specs=[
                pl.BlockSpec((tm, tk), lambda i, k: (i, k)),
                pl.BlockSpec((tk, n), lambda i, k: (k, 0)),
            ],
            out_specs=pl.BlockSpec((tm, n), lambda i, k: (i, 0)),
            scratch_shapes=[pltpu.VMEM((tm, n), jnp.float32)]),
        compiler_params=pltpu.CompilerParams(
            dimension_semantics=("parallel", "arbitrary"),
            vmem_limit_bytes=vmem_limit),
    )(a, b)


# ----------------------------------------------------------------------------
# Fused hidden layer: HW = relu(adj @ XW) @ W2
# Grid = (row tiles of adj, K tiles over n); W2 is tiny and fully resident.
# `hidden` never leaves VMEM.
# ----------------------------------------------------------------------------
def _gcn_hidden_kernel(adj_ref, xw_ref, w2_ref, o_ref, acc_ref):
    k = pl.program_id(1)

    @pl.when(k == 0)
    def _():
        acc_ref[...] = jnp.zeros_like(acc_ref)

    acc_ref[...] += jnp.dot(adj_ref[...], xw_ref[...],
                            preferred_element_type=jnp.float32)

    @pl.when(k == pl.num_programs(1) - 1)
    def _():
        hidden = jnp.maximum(acc_ref[...], 0.0).astype(jnp.bfloat16)  # relu in f32
        o_ref[...] = jnp.dot(hidden, w2_ref[...],
                             preferred_element_type=jnp.float32).astype(o_ref.dtype)


# ----------------------------------------------------------------------------
# Decoder: A_pred = sigmoid(Z @ Z.T), fed a pre-transposed Z (plain NN matmul,
# no in-kernel transpose).  Output stored as bf16 (write-bound stage).
# ----------------------------------------------------------------------------
def _decode_kernel(zi_ref, ztj_ref, o_ref):
    logits = jnp.dot(zi_ref[...], ztj_ref[...],
                     preferred_element_type=jnp.float32)
    o_ref[...] = jax.nn.sigmoid(logits).astype(o_ref.dtype)


def gae_forward(x, adj, w1, w2):
    n, f = x.shape
    h1 = w1.shape[1]
    h2 = w2.shape[1]

    # Row/contraction dims -> multiple of 256 (MXU-native 256-wide tiles on
    # v6e/v7x); hidden dims -> multiple of 128 lanes.
    n_pad = _round_up(max(n, 256), 256)
    f_pad = _round_up(max(f, 256), 256)
    h1_pad = _round_up(max(h1, 128), 128)
    h2_pad = _round_up(max(h2, 128), 128)

    # bf16 operands prepared in the wrapper (half DMA bytes, no VMEM dup).
    x_p = _pad_to(x, (n_pad, f_pad))
    adj_p = _pad_to(adj, (n_pad, n_pad))
    w1_p = _pad_to(w1, (f_pad, h1_pad))
    w2_p = _pad_to(w2, (h1_pad, h2_pad))

    vmem_limit = _vmem_limit_bytes()
    tm = 256   # encoder row tile
    tk = 256   # encoder K tile

    # ---- Stage 1: XW = X @ W1 ----
    xw = _tiled_matmul(x_p, w1_p, tm=tm, tk=tk,
                       out_dtype=jnp.bfloat16, vmem_limit=vmem_limit)

    # ---- Stage 2: HW = relu(adj @ XW) @ W2 (fused) ----
    grid = (n_pad // tm, n_pad // tk)
    hw = pl.pallas_call(
        _gcn_hidden_kernel,
        out_shape=jax.ShapeDtypeStruct((n_pad, h2_pad), jnp.bfloat16),
        grid_spec=pltpu.PrefetchScalarGridSpec(
            num_scalar_prefetch=0,
            grid=grid,
            in_specs=[
                pl.BlockSpec((tm, tk), lambda i, k: (i, k)),          # adj tile
                pl.BlockSpec((tk, h1_pad), lambda i, k: (k, 0)),      # XW K-slice
                pl.BlockSpec((h1_pad, h2_pad), lambda i, k: (0, 0)),  # W2 resident
            ],
            out_specs=pl.BlockSpec((tm, h2_pad), lambda i, k: (i, 0)),
            scratch_shapes=[pltpu.VMEM((tm, h1_pad), jnp.float32)]),
        compiler_params=pltpu.CompilerParams(
            dimension_semantics=("parallel", "arbitrary"),
            vmem_limit_bytes=vmem_limit),
    )(adj_p, xw, w2_p)

    # ---- Stage 3: Z = adj @ HW ----
    z = _tiled_matmul(adj_p, hw, tm=tm, tk=tk,
                      out_dtype=jnp.bfloat16, vmem_limit=vmem_limit)

    # ---- Stage 4: A_pred = sigmoid(Z @ Z.T) ----
    # Z is only (n_pad x h2_pad) bf16; transpose it once outside the kernel so
    # each decode tile is a standard NN matmul (no XLU transpose per tile).
    zt = z.T

    td = 512 if n_pad % 512 == 0 else 256
    dgrid = (n_pad // td, n_pad // td)
    a_pred_pad = pl.pallas_call(
        _decode_kernel,
        out_shape=jax.ShapeDtypeStruct((n_pad, n_pad), jnp.bfloat16),
        grid_spec=pltpu.PrefetchScalarGridSpec(
            num_scalar_prefetch=0,
            grid=dgrid,
            in_specs=[
                pl.BlockSpec((td, h2_pad), lambda i, j: (i, 0)),
                pl.BlockSpec((h2_pad, td), lambda i, j: (0, j)),
            ],
            out_specs=pl.BlockSpec((td, td), lambda i, j: (i, j)),
        ),
        compiler_params=pltpu.CompilerParams(
            dimension_semantics=("parallel", "parallel"),
            vmem_limit_bytes=vmem_limit),
    )(z, zt)

    # Drop zero padding (padded region is sigmoid(0)=0.5).  Result stays bf16:
    # the decoder is HBM-write-bound so the n^2 store is kept half-width.
    return a_pred_pad[:n, :n]


# ----------------------------------------------------------------------------
# Reference / test harness
# ----------------------------------------------------------------------------
def glorot_init(key, input_dim, output_dim):
    """Deterministic glorot-uniform init (mirrors the torch glorot_init)."""
    init_range = np.sqrt(6.0 / (input_dim + output_dim))
    u = jax.random.uniform(key, (input_dim, output_dim), dtype=jnp.float32)
    return u * 2.0 * init_range - init_range


def reference_forward(x, adj, w1, w2):
    h = jax.nn.relu(adj @ (x @ w1))
    z = adj @ (h @ w2)
    return jax.nn.sigmoid(z @ z.T)


if __name__ == "__main__":
    # Small synthetic graph: N nodes, feature dim == N (as implied by
    # base_gcn = GraphConvSparse(adj.shape[0], hidden1_dim, adj)).
    N = 16
    HIDDEN1 = 32
    HIDDEN2 = 16

    key = jax.random.PRNGKey(0)
    k_x, k_adj, k_w1, k_w2 = jax.random.split(key, 4)

    # Node features X: (N, N). Adjacency (dense, row-normalized-ish): (N, N).
    x = jax.random.normal(k_x, (N, N), dtype=jnp.float32)
    adj_raw = (jax.random.uniform(k_adj, (N, N)) > 0.7).astype(jnp.float32)
    adj = adj_raw + jnp.eye(N, dtype=jnp.float32)
    adj = adj / jnp.sum(adj, axis=1, keepdims=True)  # simple normalization

    # Deterministic weights (synthetic; weight_seed increments -> distinct keys).
    w1 = glorot_init(k_w1, N, HIDDEN1)        # base_gcn.weight
    w2 = glorot_init(k_w2, HIDDEN1, HIDDEN2)  # gcn_mean.weight

    a_pred = gae_forward(x, adj, w1, w2)
    a_pred = jax.block_until_ready(a_pred)

    # f32 reference; tolerance loosened because the kernels use bf16 MXU
    # operands (f32 accumulation) and a bf16 decoder output.
    a_ref = reference_forward(x, adj, w1, w2)
    np.testing.assert_allclose(np.asarray(a_pred.astype(jnp.float32)),
                               np.asarray(a_ref), rtol=2e-2, atol=2e-2)

    print("KERNEL_OK")
</pallas_src>

<mosaic_0001>
module attributes {stable_mosaic.version = 11 : i64} {
  func.func @_matmul_kernel(%arg0: i32, %arg1: i32, %arg2: memref<256x256xbf16, #tpu.memory_space<vmem>>, %arg3: memref<256x128xbf16, #tpu.memory_space<vmem>>, %arg4: memref<256x128xbf16, #tpu.memory_space<vmem>>, %arg5: memref<256x128xf32, #tpu.memory_space<vmem>>) attributes {dimension_semantics = [#tpu.dimension_semantics<parallel>, #tpu.dimension_semantics<arbitrary>], iteration_bounds = array<i64: 1, 1>, scalar_prefetch = 0 : i64, scratch_operands = 1 : i64, tpu.core_type = #tpu.core_type<tc>, window_params = [{transform_indices = @transform_0, window_bounds = array<i64: 256, 256>}, {transform_indices = @transform_1, window_bounds = array<i64: 256, 128>}, {transform_indices = @transform_2, window_bounds = array<i64: 256, 128>}]} {
    %c0_i32 = arith.constant 0 : i32
    %0 = arith.cmpi eq, %arg1, %c0_i32 : i32
    %1 = arith.extui %0 : i1 to i32
    %c0_i32_0 = arith.constant 0 : i32
    %2 = arith.cmpi ne, %1, %c0_i32_0 : i32
    scf.if %2 {
      %cst_10 = arith.constant 0.000000e+00 : f32
      %12 = vector.broadcast %cst_10 : f32 to vector<256x128xf32>
      %c0_11 = arith.constant 0 : index
      %c0_12 = arith.constant 0 : index
      %13 = vector.load %arg5[%c0_11, %c0_12] : memref<256x128xf32, #tpu.memory_space<vmem>>, vector<256x128xf32>
      tpu.vector_store %arg5[%c0_11, %c0_12], %12 {strides = array<i32>} : memref<256x128xf32, #tpu.memory_space<vmem>>, vector<256x128xf32>,
    } else {
    }
    %c0 = arith.constant 0 : index
    %c0_1 = arith.constant 0 : index
    %3 = vector.load %arg5[%c0, %c0_1] : memref<256x128xf32, #tpu.memory_space<vmem>>, vector<256x128xf32>
    %c0_2 = arith.constant 0 : index
    %c0_3 = arith.constant 0 : index
    %4 = vector.load %arg2[%c0_2, %c0_3] : memref<256x256xbf16, #tpu.memory_space<vmem>>, vector<256x256xbf16>
    %c0_4 = arith.constant 0 : index
    %c0_5 = arith.constant 0 : index
    %5 = vector.load %arg3[%c0_4, %c0_5] : memref<256x128xbf16, #tpu.memory_space<vmem>>, vector<256x128xbf16>
    %cst = arith.constant dense<0.000000e+00> : vector<256x128xf32>
    %6 = tpu.matmul %4, %5, %cst {dimension_numbers = #tpu.dot_dimension_numbers<[1], [0], [0], [1], [0, 0, 1, 1], [], []>} : vector<256x256xbf16>, vector<256x128xbf16>, vector<256x128xf32> -> vector<256x128xf32>
    %7 = arith.addf %3, %6 : vector<256x128xf32>
    %c0_6 = arith.constant 0 : index
    %c0_7 = arith.constant 0 : index
    %8 = vector.load %arg5[%c0_6, %c0_7] : memref<256x128xf32, #tpu.memory_space<vmem>>, vector<256x128xf32>
    tpu.vector_store %arg5[%c0_6, %c0_7], %7 {strides = array<i32>} : memref<256x128xf32, #tpu.memory_space<vmem>>, vector<256x128xf32>,
    %c0_i32_8 = arith.constant 0 : i32
    %9 = arith.cmpi eq, %arg1, %c0_i32_8 : i32
    %10 = arith.extui %9 : i1 to i32
    %c0_i32_9 = arith.constant 0 : i32
    %11 = arith.cmpi ne, %10, %c0_i32_9 : i32
    scf.if %11 {
      %c0_10 = arith.constant 0 : index
      %c0_11 = arith.constant 0 : index
      %12 = vector.load %arg5[%c0_10, %c0_11] : memref<256x128xf32, #tpu.memory_space<vmem>>, vector<256x128xf32>
      %13 = arith.truncf %12 : vector<256x128xf32> to vector<256x128xbf16>
      %c0_12 = arith.constant 0 : index
      %c0_13 = arith.constant 0 : index
      %14 = vector.load %arg4[%c0_12, %c0_13] : memref<256x128xbf16, #tpu.memory_space<vmem>>, vector<256x128xbf16>
      tpu.vector_store %arg4[%c0_12, %c0_13], %13 {strides = array<i32>} : memref<256x128xbf16, #tpu.memory_space<vmem>>, vector<256x128xbf16>,
    } else {
    }
    return
  }
  func.func @transform_0(%arg0: i32, %arg1: i32) -> (i32, i32) {
    %c0_i32 = arith.constant 0 : i32
    return %arg0, %arg1 : i32, i32
  }
  func.func @transform_1(%arg0: i32, %arg1: i32) -> (i32, i32) {
    %c0_i32 = arith.constant 0 : i32
    %c0_i32_0 = arith.constant 0 : i32
    return %arg1, %c0_i32 : i32, i32
  }
  func.func @transform_2(%arg0: i32, %arg1: i32) -> (i32, i32) {
    %c0_i32 = arith.constant 0 : i32
    %c0_i32_0 = arith.constant 0 : i32
    return %arg0, %c0_i32 : i32, i32
  }
}

</mosaic_0001>

<llo_original>
// kernel: tpu_custom_call.1
$region0: #{tpu_custom_call.1}
  #allocation0 [shape = 'u32[]', space=smem, size = 0x4, offset = 0x4, fixed_abs, tag = 'smem constant byte address 0x4 - core index']
  #allocation1 [shape = 'u32[144,128]{1,0:T(1,128)}', space=vmem, size = 0x12000, scoped, tag = 'internal scratch']
  #allocation2 [shape = 'f32[256,128]{1,0:T(8,128)}', space=vmem, size = 0x20000, scoped, tag = 'scratch operand']
  %s0 = inlined_call_operand.hbm [shape: bf16[256,256], index: 0, kind: input, shape index: {}]
  %s1 = inlined_call_operand.hbm [shape: bf16[256,128], index: 1, kind: input, shape index: {}]
  %s2 = inlined_call_operand.hbm [shape: bf16[256,128], index: 2, kind: output, shape index: {}]
  %s3 = sld [smem:[#allocation0]]
  $region34: #{tpu_custom_call.1} parent=0
    _
  %s5 = ssub.s32 1, %s3
  %s6 = scalar_select 0, %s5, %s3
  $region1: #{tpu_custom_call.1} parent=0
    #allocation3 [shape = 'u8[131072]{0}', space=vmem, size = 0x20000, scoped, tag = 'input window, operand 0, single buffered']
    #allocation4 [shape = 's32[1]{0}', space=sflag, size = 0x4, scoped, tag = 'scoped memory for tpu_custom_call.1']
    #allocation5 [shape = 's32[1]{0}', space=sflag, size = 0x4, scoped, tag = 'scoped memory for tpu_custom_call.1']
    #allocation6 [shape = 'u8[65536]{0}', space=vmem, size = 0x10000, scoped, tag = 'input window, operand 1, single buffered']
    #allocation7 [shape = 's32[1]{0}', space=sflag, size = 0x4, scoped, tag = 'scoped memory for tpu_custom_call.1']
    #allocation8 [shape = 'u8[65536]{0}', space=vmem, size = 0x10000, scoped, tag = 'output window, operand 0, single buffered']
    %7 = vsyncpa [#allocation4], 0
    %8 = vsyncpa [#allocation7], 0
    %9 = vsyncpa [#allocation5], 0
    // Predicated region
    $region2: #{tpu_custom_call.1} parent=1 // pred_check
      _
    $region3: #{tpu_custom_call.1} parent=1 // pred_check_branch
      %11 = sbr.rel (0) target = $region5
    $region4: #{tpu_custom_call.1} parent=1 // pred_region
      %s13 = ssub.s32 4096, 4096
      %14 = vsyncadd [#allocation4], %s13
      %s15 = sshll.u32 [#allocation3], 4
      %s16 = int_to_ptr.vmem [resolvable:$true] %s15
      %21 = dma.hbm_to_vmem [thread:$0]  %s0, 4096, %s16, [#allocation4], 128, 128, 8
    $region5: #{tpu_custom_call.1} parent=1 // pred_fallthru
      _
    // Predicated region
    $region6: #{tpu_custom_call.1} parent=1 // pred_check
      _
    $region7: #{tpu_custom_call.1} parent=1 // pred_check_branch
      %23 = sbr.rel (0) target = $region9
    $region8: #{tpu_custom_call.1} parent=1 // pred_region
      %s25 = ssub.s32 2048, 2048
      %26 = vsyncadd [#allocation7], %s25
      %s27 = sshll.u32 [#allocation6], 4
      %s28 = int_to_ptr.vmem [resolvable:$true] %s27
      %33 = dma.hbm_to_vmem [thread:$0]  %s1, 2048, %s28, [#allocation7], 64, 64, 4
    $region9: #{tpu_custom_call.1} parent=1 // pred_fallthru
      _
    // Predicated region
    $region10: #{tpu_custom_call.1} parent=1 // pred_check
      _
    $region11: #{tpu_custom_call.1} parent=1 // pred_check_branch
      %35 = sbr.rel (0) target = $region13
    $region12: #{tpu_custom_call.1} parent=1 // pred_region
      %36 = dma.done [#allocation4], 4096
    $region13: #{tpu_custom_call.1} parent=1 // pred_fallthru
      _
    // Predicated region
    $region14: #{tpu_custom_call.1} parent=1 // pred_check
      _
    $region15: #{tpu_custom_call.1} parent=1 // pred_check_branch
      %38 = sbr.rel (0) target = $region17
    $region16: #{tpu_custom_call.1} parent=1 // pred_region
      %39 = dma.done [#allocation7], 2048
    $region17: #{tpu_custom_call.1} parent=1 // pred_fallthru
      _
    %p41 = scmp.eq.s32.totalorder 0, 0
    // Predicated region
    $region18: #{tpu_custom_call.1} parent=1 // pred_check
      %p42 = pneg %p41
    $region19: #{tpu_custom_call.1} parent=1 // pred_check_branch
      %44 = sbr.rel (%p42) target = $region21
    $region20: #{tpu_custom_call.1} parent=1 // pred_region
      %45 = vst [vmem:[#allocation2] sm:$0xff] 0.0
      %46 = vst [vmem:[#allocation2 + $0x8] sm:$0xff] 0.0
      %47 = vst [vmem:[#allocation2 + $0x10] sm:$0xff] 0.0
      %48 = vst [vmem:[#allocation2 + $0x18] sm:$0xff] 0.0
      %49 = vst [vmem:[#allocation2 + $0x20] sm:$0xff] 0.0
      %50 = vst [vmem:[#allocation2 + $0x28] sm:$0xff] 0.0
      %51 = vst [vmem:[#allocation2 + $0x30] sm:$0xff] 0.0
      %52 = vst [vmem:[#allocation2 + $0x38] sm:$0xff] 0.0
      %53 = vst [vmem:[#allocation2 + $0x40] sm:$0xff] 0.0
      %54 = vst [vmem:[#allocation2 + $0x48] sm:$0xff] 0.0
      %55 = vst [vmem:[#allocation2 + $0x50] sm:$0xff] 0.0
      %56 = vst [vmem:[#allocation2 + $0x58] sm:$0xff] 0.0
      %57 = vst [vmem:[#allocation2 + $0x60] sm:$0xff] 0.0
      %58 = vst [vmem:[#allocation2 + $0x68] sm:$0xff] 0.0
      %59 = vst [vmem:[#allocation2 + $0x70] sm:$0xff] 0.0
      %60 = vst [vmem:[#allocation2 + $0x78] sm:$0xff] 0.0
      %61 = vst [vmem:[#allocation2 + $0x80] sm:$0xff] 0.0
      %62 = vst [vmem:[#allocation2 + $0x88] sm:$0xff] 0.0
      %63 = vst [vmem:[#allocation2 + $0x90] sm:$0xff] 0.0
      %64 = vst [vmem:[#allocation2 + $0x98] sm:$0xff] 0.0
      %65 = vst [vmem:[#allocation2 + $0xa0] sm:$0xff] 0.0
      %66 = vst [vmem:[#allocation2 + $0xa8] sm:$0xff] 0.0
      %67 = vst [vmem:[#allocation2 + $0xb0] sm:$0xff] 0.0
      %68 = vst [vmem:[#allocation2 + $0xb8] sm:$0xff] 0.0
      %69 = vst [vmem:[#allocation2 + $0xc0] sm:$0xff] 0.0
      %70 = vst [vmem:[#allocation2 + $0xc8] sm:$0xff] 0.0
      %71 = vst [vmem:[#allocation2 + $0xd0] sm:$0xff] 0.0
      %72 = vst [vmem:[#allocation2 + $0xd8] sm:$0xff] 0.0
      %73 = vst [vmem:[#allocation2 + $0xe0] sm:$0xff] 0.0
      %74 = vst [vmem:[#allocation2 + $0xe8] sm:$0xff] 0.0
      %75 = vst [vmem:[#allocation2 + $0xf0] sm:$0xff] 0.0
      %76 = vst [vmem:[#allocation2 + $0xf8] sm:$0xff] 0.0
    $region21: #{tpu_custom_call.1} parent=1 // pred_fallthru
      _
    %v77 = vld [vmem:[#allocation2] sm:$0xff]
    %v78 = vld [vmem:[#allocation2 + $0x8] sm:$0xff]
    %v79 = vld [vmem:[#allocation2 + $0x10] sm:$0xff]
    %v80 = vld [vmem:[#allocation2 + $0x18] sm:$0xff]
    %v81 = vld [vmem:[#allocation2 + $0x20] sm:$0xff]
    %v82 = vld [vmem:[#allocation2 + $0x28] sm:$0xff]
    %v83 = vld [vmem:[#allocation2 + $0x30] sm:$0xff]
    %v84 = vld [vmem:[#allocation2 + $0x38] sm:$0xff]
    %v85 = vld [vmem:[#allocation2 + $0x40] sm:$0xff]
    %v86 = vld [vmem:[#allocation2 + $0x48] sm:$0xff]
    %v87 = vld [vmem:[#allocation2 + $0x50] sm:$0xff]
    %v88 = vld [vmem:[#allocation2 + $0x58] sm:$0xff]
    %v89 = vld [vmem:[#allocation2 + $0x60] sm:$0xff]
    %v90 = vld [vmem:[#allocation2 + $0x68] sm:$0xff]
    %v91 = vld [vmem:[#allocation2 + $0x70] sm:$0xff]
    %v92 = vld [vmem:[#allocation2 + $0x78] sm:$0xff]
    %v93 = vld [vmem:[#allocation2 + $0x80] sm:$0xff]
    %v94 = vld [vmem:[#allocation2 + $0x88] sm:$0xff]
    %v95 = vld [vmem:[#allocation2 + $0x90] sm:$0xff]
    %v96 = vld [vmem:[#allocation2 + $0x98] sm:$0xff]
    %v97 = vld [vmem:[#allocation2 + $0xa0] sm:$0xff]
    %v98 = vld [vmem:[#allocation2 + $0xa8] sm:$0xff]
    %v99 = vld [vmem:[#allocation2 + $0xb0] sm:$0xff]
    %v100 = vld [vmem:[#allocation2 + $0xb8] sm:$0xff]
    %v101 = vld [vmem:[#allocation2 + $0xc0] sm:$0xff]
    %v102 = vld [vmem:[#allocation2 + $0xc8] sm:$0xff]
    %v103 = vld [vmem:[#allocation2 + $0xd0] sm:$0xff]
    %v104 = vld [vmem:[#allocation2 + $0xd8] sm:$0xff]
    %v105 = vld [vmem:[#allocation2 + $0xe0] sm:$0xff]
    %v106 = vld [vmem:[#allocation2 + $0xe8] sm:$0xff]
    %v107 = vld [vmem:[#allocation2 + $0xf0] sm:$0xff]
    %v108 = vld [vmem:[#allocation2 + $0xf8] sm:$0xff]
    %v109 = vld [vmem:[#allocation3] sm:$0xff]
    %v110 = vld [vmem:[#allocation3 + $0x8] sm:$0xff]
    %v111 = vld [vmem:[#allocation3 + $0x10] sm:$0xff]
    %v112 = vld [vmem:[#allocation3 + $0x18] sm:$0xff]
    %v113 = vld [vmem:[#allocation3 + $0x20] sm:$0xff]
    %v114 = vld [vmem:[#allocation3 + $0x28] sm:$0xff]
    %v115 = vld [vmem:[#allocation3 + $0x30] sm:$0xff]
    %v116 = vld [vmem:[#allocation3 + $0x38] sm:$0xff]
    %v117 = vld [vmem:[#allocation3 + $0x40] sm:$0xff]
    %v118 = vld [vmem:[#allocation3 + $0x48] sm:$0xff]
    %v119 = vld [vmem:[#allocation3 + $0x50] sm:$0xff]
    %v120 = vld [vmem:[#allocation3 + $0x58] sm:$0xff]
    %v121 = vld [vmem:[#allocation3 + $0x60] sm:$0xff]
    %v122 = vld [vmem:[#allocation3 + $0x68] sm:$0xff]
    %v123 = vld [vmem:[#allocation3 + $0x70] sm:$0xff]
    %v124 = vld [vmem:[#allocation3 + $0x78] sm:$0xff]
    %v125 = vld [vmem:[#allocation3 + $0x80] sm:$0xff]
    %v126 = vld [vmem:[#allocation3 + $0x88] sm:$0xff]
    %v127 = vld [vmem:[#allocation3 + $0x90] sm:$0xff]
    %v128 = vld [vmem:[#allocation3 + $0x98] sm:$0xff]
    %v129 = vld [vmem:[#allocation3 + $0xa0] sm:$0xff]
    %v130 = vld [vmem:[#allocation3 + $0xa8] sm:$0xff]
    %v131 = vld [vmem:[#allocation3 + $0xb0] sm:$0xff]
    %v132 = vld [vmem:[#allocation3 + $0xb8] sm:$0xff]
    %v133 = vld [vmem:[#allocation3 + $0xc0] sm:$0xff]
    %v134 = vld [vmem:[#allocation3 + $0xc8] sm:$0xff]
    %v135 = vld [vmem:[#allocation3 + $0xd0] sm:$0xff]
    %v136 = vld [vmem:[#allocation3 + $0xd8] sm:$0xff]
    %v137 = vld [vmem:[#allocation3 + $0xe0] sm:$0xff]
    %v138 = vld [vmem:[#allocation3 + $0xe8] sm:$0xff]
    %v139 = vld [vmem:[#allocation3 + $0xf0] sm:$0xff]
    %v140 = vld [vmem:[#allocation3 + $0xf8] sm:$0xff]
    %v141 = vld [vmem:[#allocation6] sm:$0xf]
    %v142 = vld [vmem:[#allocation6 + $0x4] sm:$0xf]
    %v143 = vld [vmem:[#allocation6 + $0x8] sm:$0xf]
    %v144 = vld [vmem:[#allocation6 + $0xc] sm:$0xf]
    %v145 = vld [vmem:[#allocation6 + $0x10] sm:$0xf]
    %v146 = vld [vmem:[#allocation6 + $0x14] sm:$0xf]
    %v147 = vld [vmem:[#allocation6 + $0x18] sm:$0xf]
    %v148 = vld [vmem:[#allocation6 + $0x1c] sm:$0xf]
    %v149 = vld [vmem:[#allocation6 + $0x20] sm:$0xf]
    %v150 = vld [vmem:[#allocation6 + $0x24] sm:$0xf]
    %v151 = vld [vmem:[#allocation6 + $0x28] sm:$0xf]
    %v152 = vld [vmem:[#allocation6 + $0x2c] sm:$0xf]
    %v153 = vld [vmem:[#allocation6 + $0x30] sm:$0xf]
    %v154 = vld [vmem:[#allocation6 + $0x34] sm:$0xf]
    %v155 = vld [vmem:[#allocation6 + $0x38] sm:$0xf]
    %v156 = vld [vmem:[#allocation6 + $0x3c] sm:$0xf]
    %v157 = vld [vmem:[#allocation6 + $0x40] sm:$0xf]
    %v158 = vld [vmem:[#allocation6 + $0x44] sm:$0xf]
    %v159 = vld [vmem:[#allocation6 + $0x48] sm:$0xf]
    %v160 = vld [vmem:[#allocation6 + $0x4c] sm:$0xf]
    %v161 = vld [vmem:[#allocation6 + $0x50] sm:$0xf]
    %v162 = vld [vmem:[#allocation6 + $0x54] sm:$0xf]
    %v163 = vld [vmem:[#allocation6 + $0x58] sm:$0xf]
    %v164 = vld [vmem:[#allocation6 + $0x5c] sm:$0xf]
    %v165 = vld [vmem:[#allocation6 + $0x60] sm:$0xf]
    %v166 = vld [vmem:[#allocation6 + $0x64] sm:$0xf]
    %v167 = vld [vmem:[#allocation6 + $0x68] sm:$0xf]
    %v168 = vld [vmem:[#allocation6 + $0x6c] sm:$0xf]
    %v169 = vld [vmem:[#allocation6 + $0x70] sm:$0xf]
    %v170 = vld [vmem:[#allocation6 + $0x74] sm:$0xf]
    %v171 = vld [vmem:[#allocation6 + $0x78] sm:$0xf]
    %v172 = vld [vmem:[#allocation6 + $0x7c] sm:$0xf]
    %v205 = vunpack.c.l.b16 %v109
    %v206 = vunpack.c.h.b16 %v109
    %v207 = vunpack.c.l.b16 %v110
    %v208 = vunpack.c.h.b16 %v110
    %v209 = vunpack.c.l.b16 %v111
    %v210 = vunpack.c.h.b16 %v111
    %v211 = vunpack.c.l.b16 %v112
    %v212 = vunpack.c.h.b16 %v112
    %v213 = vunpack.c.l.b16 %v113
    %v214 = vunpack.c.h.b16 %v113
    %v215 = vunpack.c.l.b16 %v114
    %v216 = vunpack.c.h.b16 %v114
    %v217 = vunpack.c.l.b16 %v115
    %v218 = vunpack.c.h.b16 %v115
    %v219 = vunpack.c.l.b16 %v116
    %v220 = vunpack.c.h.b16 %v116
    %v221 = vunpack.c.l.b16 %v117
    %v222 = vunpack.c.h.b16 %v117
    %v223 = vunpack.c.l.b16 %v118
    %v224 = vunpack.c.h.b16 %v118
    %v225 = vunpack.c.l.b16 %v119
    %v226 = vunpack.c.h.b16 %v119
    %v227 = vunpack.c.l.b16 %v120
    %v228 = vunpack.c.h.b16 %v120
    %v229 = vunpack.c.l.b16 %v121
    %v230 = vunpack.c.h.b16 %v121
    %v231 = vunpack.c.l.b16 %v122
    %v232 = vunpack.c.h.b16 %v122
    %v233 = vunpack.c.l.b16 %v123
    %v234 = vunpack.c.h.b16 %v123
    %v235 = vunpack.c.l.b16 %v124
    %v236 = vunpack.c.h.b16 %v124
    %v237 = vunpack.c.l.b16 %v125
    %v238 = vunpack.c.h.b16 %v125
    %v239 = vunpack.c.l.b16 %v126
    %v240 = vunpack.c.h.b16 %v126
    %v241 = vunpack.c.l.b16 %v127
    %v242 = vunpack.c.h.b16 %v127
    %v243 = vunpack.c.l.b16 %v128
    %v244 = vunpack.c.h.b16 %v128
    %v245 = vunpack.c.l.b16 %v129
    %v246 = vunpack.c.h.b16 %v129
    %v247 = vunpack.c.l.b16 %v130
    %v248 = vunpack.c.h.b16 %v130
    %v249 = vunpack.c.l.b16 %v131
    %v250 = vunpack.c.h.b16 %v131
    %v251 = vunpack.c.l.b16 %v132
    %v252 = vunpack.c.h.b16 %v132
    %v253 = vunpack.c.l.b16 %v133
    %v254 = vunpack.c.h.b16 %v133
    %v255 = vunpack.c.l.b16 %v134
    %v256 = vunpack.c.h.b16 %v134
    %v257 = vunpack.c.l.b16 %v135
    %v258 = vunpack.c.h.b16 %v135
    %v259 = vunpack.c.l.b16 %v136
    %v260 = vunpack.c.h.b16 %v136
    %v261 = vunpack.c.l.b16 %v137
    %v262 = vunpack.c.h.b16 %v137
    %v263 = vunpack.c.l.b16 %v138
    %v264 = vunpack.c.h.b16 %v138
    %v265 = vunpack.c.l.b16 %v139
    %v266 = vunpack.c.h.b16 %v139
    %v267 = vunpack.c.l.b16 %v140
    %v268 = vunpack.c.h.b16 %v140
    %v269 = vpack.c.b16 %v207, %v205
    %v270 = vpack.c.b16 %v208, %v206
    %v271 = vpack.c.b16 %v211, %v209
    %v272 = vpack.c.b16 %v212, %v210
    %v273 = vpack.c.b16 %v215, %v213
    %v274 = vpack.c.b16 %v216, %v214
    %v275 = vpack.c.b16 %v219, %v217
    %v276 = vpack.c.b16 %v220, %v218
    %v277 = vpack.c.b16 %v223, %v221
    %v278 = vpack.c.b16 %v224, %v222
    %v279 = vpack.c.b16 %v227, %v225
    %v280 = vpack.c.b16 %v228, %v226
    %v281 = vpack.c.b16 %v231, %v229
    %v282 = vpack.c.b16 %v232, %v230
    %v283 = vpack.c.b16 %v235, %v233
    %v284 = vpack.c.b16 %v236, %v234
    %v285 = vpack.c.b16 %v239, %v237
    %v286 = vpack.c.b16 %v240, %v238
    %v287 = vpack.c.b16 %v243, %v241
    %v288 = vpack.c.b16 %v244, %v242
    %v289 = vpack.c.b16 %v247, %v245
    %v290 = vpack.c.b16 %v248, %v246
    %v291 = vpack.c.b16 %v251, %v249
    %v292 = vpack.c.b16 %v252, %v250
    %v293 = vpack.c.b16 %v255, %v253
    %v294 = vpack.c.b16 %v256, %v254
    %v295 = vpack.c.b16 %v259, %v257
    %v296 = vpack.c.b16 %v260, %v258
    %v297 = vpack.c.b16 %v263, %v261
    %v298 = vpack.c.b16 %v264, %v262
    %v299 = vpack.c.b16 %v267, %v265
    %v300 = vpack.c.b16 %v268, %v266
    %v365 = vunpack.c.l.b16 %v141
    %v366 = vunpack.c.l.b16 %v142
    %v367 = vunpack.c.l.b16 %v143
    %v368 = vunpack.c.l.b16 %v144
    %v369 = vunpack.c.l.b16 %v145
    %v370 = vunpack.c.l.b16 %v146
    %v371 = vunpack.c.l.b16 %v147
    %v372 = vunpack.c.l.b16 %v148
    %v373 = vunpack.c.l.b16 %v149
    %v374 = vunpack.c.l.b16 %v150
    %v375 = vunpack.c.l.b16 %v151
    %v376 = vunpack.c.l.b16 %v152
    %v377 = vunpack.c.l.b16 %v153
    %v378 = vunpack.c.l.b16 %v154
    %v379 = vunpack.c.l.b16 %v155
    %v380 = vunpack.c.l.b16 %v156
    %v381 = vunpack.c.l.b16 %v157
    %v382 = vunpack.c.l.b16 %v158
    %v383 = vunpack.c.l.b16 %v159
    %v384 = vunpack.c.l.b16 %v160
    %v385 = vunpack.c.l.b16 %v161
    %v386 = vunpack.c.l.b16 %v162
    %v387 = vunpack.c.l.b16 %v163
    %v388 = vunpack.c.l.b16 %v164
    %v389 = vunpack.c.l.b16 %v165
    %v390 = vunpack.c.l.b16 %v166
    %v391 = vunpack.c.l.b16 %v167
    %v392 = vunpack.c.l.b16 %v168
    %v393 = vunpack.c.l.b16 %v169
    %v394 = vunpack.c.l.b16 %v170
    %v395 = vunpack.c.l.b16 %v171
    %v396 = vunpack.c.l.b16 %v172
    %v397 = vpack.c.b16 %v366, %v365
    %v398 = vpack.c.b16 %v368, %v367
    %v399 = vpack.c.b16 %v370, %v369
    %v400 = vpack.c.b16 %v372, %v371
    %v401 = vpack.c.b16 %v374, %v373
    %v402 = vpack.c.b16 %v376, %v375
    %v403 = vpack.c.b16 %v378, %v377
    %v404 = vpack.c.b16 %v380, %v379
    %v405 = vpack.c.b16 %v382, %v381
    %v406 = vpack.c.b16 %v384, %v383
    %v407 = vpack.c.b16 %v386, %v385
    %v408 = vpack.c.b16 %v388, %v387
    %v409 = vpack.c.b16 %v390, %v389
    %v410 = vpack.c.b16 %v392, %v391
    %v411 = vpack.c.b16 %v394, %v393
    %v412 = vpack.c.b16 %v396, %v395
    %429 = vmatprep.subr.bf16.mxu0 0
    %430 = vmatpush1.bf16.msra.mxu0 %v397
    %431 = vmatprep.subr.bf16.mxu0 0
    %432 = vmatpush1.bf16.msra.mxu0 %v398
    %433 = vmatprep.subr.bf16.mxu0 0
    %434 = vmatpush1.bf16.msra.mxu0 %v399
    %435 = vmatprep.subr.bf16.mxu0 0
    %436 = vmatpush1.bf16.msra.mxu0 %v400
    %437 = vmatprep.subr.bf16.mxu0 0
    %438 = vmatpush1.bf16.msra.mxu0 %v401
    %439 = vmatprep.subr.bf16.mxu0 0
    %440 = vmatpush1.bf16.msra.mxu0 %v402
    %441 = vmatprep.subr.bf16.mxu0 0
    %442 = vmatpush1.bf16.msra.mxu0 %v403
    %443 = vmatprep.subr.bf16.mxu0 0
    %444 = vmatpush1.bf16.msra.mxu0 %v404
    %445 = vmatprep.subr.bf16.mxu0 0
    %446 = vmatpush1.bf16.msra.mxu0 %v405
    %447 = vmatprep.subr.bf16.mxu0 0
    %448 = vmatpush1.bf16.msra.mxu0 %v406
    %449 = vmatprep.subr.bf16.mxu0 0
    %450 = vmatpush1.bf16.msra.mxu0 %v407
    %451 = vmatprep.subr.bf16.mxu0 0
    %452 = vmatpush1.bf16.msra.mxu0 %v408
    %453 = vmatprep.subr.bf16.mxu0 0
    %454 = vmatpush1.bf16.msra.mxu0 %v409
    %455 = vmatprep.subr.bf16.mxu0 0
    %456 = vmatpush1.bf16.msra.mxu0 %v410
    %457 = vmatprep.subr.bf16.mxu0 0
    %458 = vmatpush1.bf16.msra.mxu0 %v411
    %459 = vmatprep.subr.bf16.mxu0 0
    %460 = vmatpush1.bf16.msra.mxu0 %v412
    %461 = vmatprep.mubr.bf16.mxu0 %v270
    %462 = vmatmul.mubr.bf16.gmra.mrb[0].mxu0 %v269
    %v463 = vpop.f32.mrb[0].mxu0
    %v464 = vadd.f32 0.0, %v463
    %v465 = vpop.f32.mrb[0].mxu0
    %v466 = vpop.f32.mrb[0].mxu0
    %v467 = vadd.f32 0.0, %v466
    %v468 = vpop.f32.mrb[0].mxu0
    %469 = vmatprep.mubr.bf16.mxu0 %v272
    %470 = vmatmul.mubr.bf16.gmra.mrb[0].mxu0 %v271
    %v471 = vpop.f32.mrb[0].mxu0
    %v472 = vadd.f32 0.0, %v471
    %v473 = vpop.f32.mrb[0].mxu0
    %v474 = vpop.f32.mrb[0].mxu0
    %v475 = vadd.f32 0.0, %v474
    %v476 = vpop.f32.mrb[0].mxu0
    %477 = vmatprep.mubr.bf16.mxu0 %v274
    %478 = vmatmul.mubr.bf16.gmra.mrb[0].mxu0 %v273
    %v479 = vpop.f32.mrb[0].mxu0
    %v480 = vadd.f32 0.0, %v479
    %v481 = vpop.f32.mrb[0].mxu0
    %v482 = vpop.f32.mrb[0].mxu0
    %v483 = vadd.f32 0.0, %v482
    %v484 = vpop.f32.mrb[0].mxu0
    %485 = vmatprep.mubr.bf16.mxu0 %v276
    %486 = vmatmul.mubr.bf16.gmra.mrb[0].mxu0 %v275
    %v487 = vpop.f32.mrb[0].mxu0
    %v488 = vadd.f32 0.0, %v487
    %v489 = vpop.f32.mrb[0].mxu0
    %v490 = vpop.f32.mrb[0].mxu0
    %v491 = vadd.f32 0.0, %v490
    %v492 = vpop.f32.mrb[0].mxu0
    %493 = vmatprep.mubr.bf16.mxu0 %v278
    %494 = vmatmul.mubr.bf16.gmra.mrb[0].mxu0 %v277
    %v495 = vpop.f32.mrb[0].mxu0
    %v496 = vadd.f32 0.0, %v495
    %v497 = vpop.f32.mrb[0].mxu0
    %v498 = vpop.f32.mrb[0].mxu0
    %v499 = vadd.f32 0.0, %v498
    %v500 = vpop.f32.mrb[0].mxu0
    %501 = vmatprep.mubr.bf16.mxu0 %v280
    %502 = vmatmul.mubr.bf16.gmra.mrb[0].mxu0 %v279
    %v503 = vpop.f32.mrb[0].mxu0
    %v504 = vadd.f32 0.0, %v503
    %v505 = vpop.f32.mrb[0].mxu0
    %v506 = vpop.f32.mrb[0].mxu0
    %v507 = vadd.f32 0.0, %v506
    %v508 = vpop.f32.mrb[0].mxu0
    %509 = vmatprep.mubr.bf16.mxu0 %v282
    %510 = vmatmul.mubr.bf16.gmra.mrb[0].mxu0 %v281
    %v511 = vpop.f32.mrb[0].mxu0
    %v512 = vadd.f32 0.0, %v511
    %v513 = vpop.f32.mrb[0].mxu0
    %v514 = vpop.f32.mrb[0].mxu0
    %v515 = vadd.f32 0.0, %v514
    %v516 = vpop.f32.mrb[0].mxu0
    %517 = vmatprep.mubr.bf16.mxu0 %v284
    %518 = vmatmul.mubr.bf16.gmra.mrb[0].mxu0 %v283
    %v519 = vpop.f32.mrb[0].mxu0
    %v520 = vadd.f32 0.0, %v519
    %v521 = vpop.f32.mrb[0].mxu0
    %v522 = vpop.f32.mrb[0].mxu0
    %v523 = vadd.f32 0.0, %v522
    %v524 = vpop.f32.mrb[0].mxu0
    %525 = vmatprep.mubr.bf16.mxu0 %v286
    %526 = vmatmul.mubr.bf16.gmra.mrb[0].mxu0 %v285
    %v527 = vpop.f32.mrb[0].mxu0
    %v528 = vadd.f32 0.0, %v527
    %v529 = vpop.f32.mrb[0].mxu0
    %v530 = vpop.f32.mrb[0].mxu0
    %v531 = vadd.f32 0.0, %v530
    %v532 = vpop.f32.mrb[0].mxu0
    %533 = vmatprep.mubr.bf16.mxu0 %v288
    %534 = vmatmul.mubr.bf16.gmra.mrb[0].mxu0 %v287
    %v535 = vpop.f32.mrb[0].mxu0
    %v536 = vadd.f32 0.0, %v535
    %v537 = vpop.f32.mrb[0].mxu0
    %v538 = vpop.f32.mrb[0].mxu0
    %v539 = vadd.f32 0.0, %v538
    %v540 = vpop.f32.mrb[0].mxu0
    %541 = vmatprep.mubr.bf16.mxu0 %v290
    %542 = vmatmul.mubr.bf16.gmra.mrb[0].mxu0 %v289
    %v543 = vpop.f32.mrb[0].mxu0
    %v544 = vadd.f32 0.0, %v543
    %v545 = vpop.f32.mrb[0].mxu0
    %v546 = vpop.f32.mrb[0].mxu0
    %v547 = vadd.f32 0.0, %v546
    %v548 = vpop.f32.mrb[0].mxu0
    %549 = vmatprep.mubr.bf16.mxu0 %v292
    %550 = vmatmul.mubr.bf16.gmra.mrb[0].mxu0 %v291
    %v551 = vpop.f32.mrb[0].mxu0
    %v552 = vadd.f32 0.0, %v551
    %v553 = vpop.f32.mrb[0].mxu0
    %v554 = vpop.f32.mrb[0].mxu0
    %v555 = vadd.f32 0.0, %v554
    %v556 = vpop.f32.mrb[0].mxu0
    %557 = vmatprep.mubr.bf16.mxu0 %v294
    %558 = vmatmul.mubr.bf16.gmra.mrb[0].mxu0 %v293
    %v559 = vpop.f32.mrb[0].mxu0
    %v560 = vadd.f32 0.0, %v559
    %v561 = vpop.f32.mrb[0].mxu0
    %v562 = vpop.f32.mrb[0].mxu0
    %v563 = vadd.f32 0.0, %v562
    %v564 = vpop.f32.mrb[0].mxu0
    %565 = vmatprep.mubr.bf16.mxu0 %v296
    %566 = vmatmul.mubr.bf16.gmra.mrb[0].mxu0 %v295
    %v567 = vpop.f32.mrb[0].mxu0
    %v568 = vadd.f32 0.0, %v567
    %v569 = vpop.f32.mrb[0].mxu0
    %v570 = vpop.f32.mrb[0].mxu0
    %v571 = vadd.f32 0.0, %v570
    %v572 = vpop.f32.mrb[0].mxu0
    %573 = vmatprep.mubr.bf16.mxu0 %v298
    %574 = vmatmul.mubr.bf16.gmra.mrb[0].mxu0 %v297
    %v575 = vpop.f32.mrb[0].mxu0
    %v576 = vadd.f32 0.0, %v575
    %v577 = vpop.f32.mrb[0].mxu0
    %v578 = vpop.f32.mrb[0].mxu0
    %v579 = vadd.f32 0.0, %v578
    %v580 = vpop.f32.mrb[0].mxu0
    %581 = vmatprep.mubr.bf16.mxu0 %v300
    %582 = vmatmul.mubr.bf16.gmra.mrb[0].mxu0 %v299
    %v583 = vpop.f32.mrb[0].mxu0
    %v584 = vadd.f32 0.0, %v583
    %v585 = vpop.f32.mrb[0].mxu0
    %v586 = vpop.f32.mrb[0].mxu0
    %v587 = vadd.f32 0.0, %v586
    %v588 = vpop.f32.mrb[0].mxu0
    %589 = vdwg.mxu0
    %v590 = vadd.f32 %v77, %v464
    %v591 = vadd.f32 %v78, %v467
    %v592 = vadd.f32 %v79, %v472
    %v593 = vadd.f32 %v80, %v475
    %v594 = vadd.f32 %v81, %v480
    %v595 = vadd.f32 %v82, %v483
    %v596 = vadd.f32 %v83, %v488
    %v597 = vadd.f32 %v84, %v491
    %v598 = vadd.f32 %v85, %v496
    %v599 = vadd.f32 %v86, %v499
    %v600 = vadd.f32 %v87, %v504
    %v601 = vadd.f32 %v88, %v507
    %v602 = vadd.f32 %v89, %v512
    %v603 = vadd.f32 %v90, %v515
    %v604 = vadd.f32 %v91, %v520
    %v605 = vadd.f32 %v92, %v523
    %v606 = vadd.f32 %v93, %v528
    %v607 = vadd.f32 %v94, %v531
    %v608 = vadd.f32 %v95, %v536
    %v609 = vadd.f32 %v96, %v539
    %v610 = vadd.f32 %v97, %v544
    %v611 = vadd.f32 %v98, %v547
    %v612 = vadd.f32 %v99, %v552
    %v613 = vadd.f32 %v100, %v555
    %v614 = vadd.f32 %v101, %v560
    %v615 = vadd.f32 %v102, %v563
    %v616 = vadd.f32 %v103, %v568
    %v617 = vadd.f32 %v104, %v571
    %v618 = vadd.f32 %v105, %v576
    %v619 = vadd.f32 %v106, %v579
    %v620 = vadd.f32 %v107, %v584
    %v621 = vadd.f32 %v108, %v587
    %622 = vst [vmem:[#allocation2] sm:$0xff] %v590
    %623 = vst [vmem:[#allocation2 + $0x8] sm:$0xff] %v591
    %624 = vst [vmem:[#allocation2 + $0x10] sm:$0xff] %v592
    %625 = vst [vmem:[#allocation2 + $0x18] sm:$0xff] %v593
    %626 = vst [vmem:[#allocation2 + $0x20] sm:$0xff] %v594
    %627 = vst [vmem:[#allocation2 + $0x28] sm:$0xff] %v595
    %628 = vst [vmem:[#allocation2 + $0x30] sm:$0xff] %v596
    %629 = vst [vmem:[#allocation2 + $0x38] sm:$0xff] %v597
    %630 = vst [vmem:[#allocation2 + $0x40] sm:$0xff] %v598
    %631 = vst [vmem:[#allocation2 + $0x48] sm:$0xff] %v599
    %632 = vst [vmem:[#allocation2 + $0x50] sm:$0xff] %v600
    %633 = vst [vmem:[#allocation2 + $0x58] sm:$0xff] %v601
    %634 = vst [vmem:[#allocation2 + $0x60] sm:$0xff] %v602
    %635 = vst [vmem:[#allocation2 + $0x68] sm:$0xff] %v603
    %636 = vst [vmem:[#allocation2 + $0x70] sm:$0xff] %v604
    %637 = vst [vmem:[#allocation2 + $0x78] sm:$0xff] %v605
    %638 = vst [vmem:[#allocation2 + $0x80] sm:$0xff] %v606
    %639 = vst [vmem:[#allocation2 + $0x88] sm:$0xff] %v607
    %640 = vst [vmem:[#allocation2 + $0x90] sm:$0xff] %v608
    %641 = vst [vmem:[#allocation2 + $0x98] sm:$0xff] %v609
    %642 = vst [vmem:[#allocation2 + $0xa0] sm:$0xff] %v610
    %643 = vst [vmem:[#allocation2 + $0xa8] sm:$0xff] %v611
    %644 = vst [vmem:[#allocation2 + $0xb0] sm:$0xff] %v612
    %645 = vst [vmem:[#allocation2 + $0xb8] sm:$0xff] %v613
    %646 = vst [vmem:[#allocation2 + $0xc0] sm:$0xff] %v614
    %647 = vst [vmem:[#allocation2 + $0xc8] sm:$0xff] %v615
    %648 = vst [vmem:[#allocation2 + $0xd0] sm:$0xff] %v616
    %649 = vst [vmem:[#allocation2 + $0xd8] sm:$0xff] %v617
    %650 = vst [vmem:[#allocation2 + $0xe0] sm:$0xff] %v618
    %651 = vst [vmem:[#allocation2 + $0xe8] sm:$0xff] %v619
    %652 = vst [vmem:[#allocation2 + $0xf0] sm:$0xff] %v620
    %653 = vst [vmem:[#allocation2 + $0xf8] sm:$0xff] %v621
    // Predicated region
    $region22: #{tpu_custom_call.1} parent=1 // pred_check
      %p654 = pneg %p41
    $region23: #{tpu_custom_call.1} parent=1 // pred_check_branch
      %656 = sbr.rel (%p654) target = $region25
    $region24: #{tpu_custom_call.1} parent=1 // pred_region
      %v657 = vld [vmem:[#allocation2] sm:$0xff]
      %v658 = vld [vmem:[#allocation2 + $0x8] sm:$0xff]
      %v659 = vld [vmem:[#allocation2 + $0x10] sm:$0xff]
      %v660 = vld [vmem:[#allocation2 + $0x18] sm:$0xff]
      %v661 = vld [vmem:[#allocation2 + $0x20] sm:$0xff]
      %v662 = vld [vmem:[#allocation2 + $0x28] sm:$0xff]
      %v663 = vld [vmem:[#allocation2 + $0x30] sm:$0xff]
      %v664 = vld [vmem:[#allocation2 + $0x38] sm:$0xff]
      %v665 = vld [vmem:[#allocation2 + $0x40] sm:$0xff]
      %v666 = vld [vmem:[#allocation2 + $0x48] sm:$0xff]
      %v667 = vld [vmem:[#allocation2 + $0x50] sm:$0xff]
      %v668 = vld [vmem:[#allocation2 + $0x58] sm:$0xff]
      %v669 = vld [vmem:[#allocation2 + $0x60] sm:$0xff]
      %v670 = vld [vmem:[#allocation2 + $0x68] sm:$0xff]
      %v671 = vld [vmem:[#allocation2 + $0x70] sm:$0xff]
      %v672 = vld [vmem:[#allocation2 + $0x78] sm:$0xff]
      %v673 = vld [vmem:[#allocation2 + $0x80] sm:$0xff]
      %v674 = vld [vmem:[#allocation2 + $0x88] sm:$0xff]
      %v675 = vld [vmem:[#allocation2 + $0x90] sm:$0xff]
      %v676 = vld [vmem:[#allocation2 + $0x98] sm:$0xff]
      %v677 = vld [vmem:[#allocation2 + $0xa0] sm:$0xff]
      %v678 = vld [vmem:[#allocation2 + $0xa8] sm:$0xff]
      %v679 = vld [vmem:[#allocation2 + $0xb0] sm:$0xff]
      %v680 = vld [vmem:[#allocation2 + $0xb8] sm:$0xff]
      %v681 = vld [vmem:[#allocation2 + $0xc0] sm:$0xff]
      %v682 = vld [vmem:[#allocation2 + $0xc8] sm:$0xff]
      %v683 = vld [vmem:[#allocation2 + $0xd0] sm:$0xff]
      %v684 = vld [vmem:[#allocation2 + $0xd8] sm:$0xff]
      %v685 = vld [vmem:[#allocation2 + $0xe0] sm:$0xff]
      %v686 = vld [vmem:[#allocation2 + $0xe8] sm:$0xff]
      %v687 = vld [vmem:[#allocation2 + $0xf0] sm:$0xff]
      %v688 = vld [vmem:[#allocation2 + $0xf8] sm:$0xff]
      %v689 = vpack.c.bf16 %v658, %v657
      %v690 = vpack.c.bf16 %v660, %v659
      %v691 = vpack.c.bf16 %v662, %v661
      %v692 = vpack.c.bf16 %v664, %v663
      %v693 = vpack.c.bf16 %v666, %v665
      %v694 = vpack.c.bf16 %v668, %v667
      %v695 = vpack.c.bf16 %v670, %v669
      %v696 = vpack.c.bf16 %v672, %v671
      %v697 = vpack.c.bf16 %v674, %v673
      %v698 = vpack.c.bf16 %v676, %v675
      %v699 = vpack.c.bf16 %v678, %v677
      %v700 = vpack.c.bf16 %v680, %v679
      %v701 = vpack.c.bf16 %v682, %v681
      %v702 = vpack.c.bf16 %v684, %v683
      %v703 = vpack.c.bf16 %v686, %v685
      %v704 = vpack.c.bf16 %v688, %v687
      %v721 = vunpack.c.l.b16 %v689
      %v722 = vunpack.c.h.b16 %v689
      %v723 = vunpack.c.l.b16 %v690
      %v724 = vunpack.c.h.b16 %v690
      %v725 = vunpack.c.l.b16 %v691
      %v726 = vunpack.c.h.b16 %v691
      %v727 = vunpack.c.l.b16 %v692
      %v728 = vunpack.c.h.b16 %v692
      %v729 = vunpack.c.l.b16 %v693
      %v730 = vunpack.c.h.b16 %v693
      %v731 = vunpack.c.l.b16 %v694
      %v732 = vunpack.c.h.b16 %v694
      %v733 = vunpack.c.l.b16 %v695
      %v734 = vunpack.c.h.b16 %v695
      %v735 = vunpack.c.l.b16 %v696
      %v736 = vunpack.c.h.b16 %v696
      %v737 = vunpack.c.l.b16 %v697
      %v738 = vunpack.c.h.b16 %v697
      %v739 = vunpack.c.l.b16 %v698
      %v740 = vunpack.c.h.b16 %v698
      %v741 = vunpack.c.l.b16 %v699
      %v742 = vunpack.c.h.b16 %v699
      %v743 = vunpack.c.l.b16 %v700
      %v744 = vunpack.c.h.b16 %v700
      %v745 = vunpack.c.l.b16 %v701
      %v746 = vunpack.c.h.b16 %v701
      %v747 = vunpack.c.l.b16 %v702
      %v748 = vunpack.c.h.b16 %v702
      %v749 = vunpack.c.l.b16 %v703
      %v750 = vunpack.c.h.b16 %v703
      %v751 = vunpack.c.l.b16 %v704
      %v752 = vunpack.c.h.b16 %v704
      %v753 = vpack.c.b16 %v721, %v721
      %v754 = vpack.c.b16 %v722, %v722
      %v755 = vpack.c.b16 %v723, %v723
      %v756 = vpack.c.b16 %v724, %v724
      %v757 = vpack.c.b16 %v725, %v725
      %v758 = vpack.c.b16 %v726, %v726
      %v759 = vpack.c.b16 %v727, %v727
      %v760 = vpack.c.b16 %v728, %v728
      %v761 = vpack.c.b16 %v729, %v729
      %v762 = vpack.c.b16 %v730, %v730
      %v763 = vpack.c.b16 %v731, %v731
      %v764 = vpack.c.b16 %v732, %v732
      %v765 = vpack.c.b16 %v733, %v733
      %v766 = vpack.c.b16 %v734, %v734
      %v767 = vpack.c.b16 %v735, %v735
      %v768 = vpack.c.b16 %v736, %v736
      %v769 = vpack.c.b16 %v737, %v737
      %v770 = vpack.c.b16 %v738, %v738
      %v771 = vpack.c.b16 %v739, %v739
      %v772 = vpack.c.b16 %v740, %v740
      %v773 = vpack.c.b16 %v741, %v741
      %v774 = vpack.c.b16 %v742, %v742
      %v775 = vpack.c.b16 %v743, %v743
      %v776 = vpack.c.b16 %v744, %v744
      %v777 = vpack.c.b16 %v745, %v745
      %v778 = vpack.c.b16 %v746, %v746
      %v779 = vpack.c.b16 %v747, %v747
      %v780 = vpack.c.b16 %v748, %v748
      %v781 = vpack.c.b16 %v749, %v749
      %v782 = vpack.c.b16 %v750, %v750
      %v783 = vpack.c.b16 %v751, %v751
      %v784 = vpack.c.b16 %v752, %v752
      %817 = vst [vmem:[#allocation8] sm:$0xf] %v753
      %818 = vst [vmem:[#allocation8 + $0x4] sm:$0xf] %v754
      %819 = vst [vmem:[#allocation8 + $0x8] sm:$0xf] %v755
      %820 = vst [vmem:[#allocation8 + $0xc] sm:$0xf] %v756
      %821 = vst [vmem:[#allocation8 + $0x10] sm:$0xf] %v757
      %822 = vst [vmem:[#allocation8 + $0x14] sm:$0xf] %v758
      %823 = vst [vmem:[#allocation8 + $0x18] sm:$0xf] %v759
      %824 = vst [vmem:[#allocation8 + $0x1c] sm:$0xf] %v760
      %825 = vst [vmem:[#allocation8 + $0x20] sm:$0xf] %v761
      %826 = vst [vmem:[#allocation8 + $0x24] sm:$0xf] %v762
      %827 = vst [vmem:[#allocation8 + $0x28] sm:$0xf] %v763
      %828 = vst [vmem:[#allocation8 + $0x2c] sm:$0xf] %v764
      %829 = vst [vmem:[#allocation8 + $0x30] sm:$0xf] %v765
      %830 = vst [vmem:[#allocation8 + $0x34] sm:$0xf] %v766
      %831 = vst [vmem:[#allocation8 + $0x38] sm:$0xf] %v767
      %832 = vst [vmem:[#allocation8 + $0x3c] sm:$0xf] %v768
      %833 = vst [vmem:[#allocation8 + $0x40] sm:$0xf] %v769
      %834 = vst [vmem:[#allocation8 + $0x44] sm:$0xf] %v770
      %835 = vst [vmem:[#allocation8 + $0x48] sm:$0xf] %v771
      %836 = vst [vmem:[#allocation8 + $0x4c] sm:$0xf] %v772
      %837 = vst [vmem:[#allocation8 + $0x50] sm:$0xf] %v773
      %838 = vst [vmem:[#allocation8 + $0x54] sm:$0xf] %v774
      %839 = vst [vmem:[#allocation8 + $0x58] sm:$0xf] %v775
      %840 = vst [vmem:[#allocation8 + $0x5c] sm:$0xf] %v776
      %841 = vst [vmem:[#allocation8 + $0x60] sm:$0xf] %v777
      %842 = vst [vmem:[#allocation8 + $0x64] sm:$0xf] %v778
      %843 = vst [vmem:[#allocation8 + $0x68] sm:$0xf] %v779
      %844 = vst [vmem:[#allocation8 + $0x6c] sm:$0xf] %v780
      %845 = vst [vmem:[#allocation8 + $0x70] sm:$0xf] %v781
      %846 = vst [vmem:[#allocation8 + $0x74] sm:$0xf] %v782
      %847 = vst [vmem:[#allocation8 + $0x78] sm:$0xf] %v783
      %848 = vst [vmem:[#allocation8 + $0x7c] sm:$0xf] %v784
    $region25: #{tpu_custom_call.1} parent=1 // pred_fallthru
      _
    // Predicated region
    $region26: #{tpu_custom_call.1} parent=1 // pred_check
      _
    $region27: #{tpu_custom_call.1} parent=1 // pred_check_branch
      %850 = sbr.rel (0) target = $region29
    $region28: #{tpu_custom_call.1} parent=1 // pred_region
      %s852 = ssub.s32 2048, 2048
      %853 = vsyncadd [#allocation5], %s852
      %s854 = sshll.u32 [#allocation8], 4
      %s855 = int_to_ptr.vmem [resolvable:$true] %s854
      %860 = dma.vmem_to_hbm [thread:$0]  %s855, 2048, %s2, [#allocation5], 64, 64, 4
    $region29: #{tpu_custom_call.1} parent=1 // pred_fallthru
      _
    // Predicated region
    $region30: #{tpu_custom_call.1} parent=1 // pred_check
      _
    $region31: #{tpu_custom_call.1} parent=1 // pred_check_branch
      %862 = sbr.rel (0) target = $region33
    $region32: #{tpu_custom_call.1} parent=1 // pred_region
      %863 = dma.done [#allocation5], 2048
    $region33: #{tpu_custom_call.1} parent=1 // pred_fallthru
      _
    %864 = vsyncpa [#allocation4], 1
    %865 = vsyncpa [#allocation7], 1
    %866 = vsyncpa [#allocation5], 1

</llo_original>
